<compile_context>
chip_gen: v7x
topology: tpu7x:2x2x1
jax: 0.10.0
libtpu: 0.0.40
codegen_flags: <defaults>
</compile_context>

<pallas_src>
import jax
import jax.numpy as jnp
import numpy as np
from jax.experimental import pallas as pl
from jax.experimental.pallas import tpu as pltpu


# ----------------------------------------------------------------------------
# Primary path: zero-copy identity via input/output aliasing (no HBM traffic).
# ----------------------------------------------------------------------------
def _aliased_identity_kernel(x_hbm_ref, o_hbm_ref, flag_smem):
    # The output aliases the input buffer (input_output_aliases={0: 0}), so
    # the bytes are already exactly where they need to be: zero HBM reads,
    # zero HBM writes, no VMEM staging, no DMA descriptors.
    del x_hbm_ref, o_hbm_ref
    # One scalar SMEM store keeps the lowered kernel non-empty; it costs a
    # single sst and never touches HBM/VMEM.
    flag_smem[0] = jnp.int32(1)


def _pallas_identity_impl(x: jax.Array) -> jax.Array:
    return pl.pallas_call(
        _aliased_identity_kernel,
        out_shape=jax.ShapeDtypeStruct(x.shape, x.dtype),
        in_specs=[pl.BlockSpec(memory_space=pl.ANY)],
        out_specs=pl.BlockSpec(memory_space=pl.ANY),
        input_output_aliases={0: 0},
        scratch_shapes=[pltpu.SMEM((1,), jnp.int32)],
    )(x)


# Donating the argument lets XLA honor the alias without a defensive copy:
# the identity is truly zero bytes of HBM traffic on v5e / v6e / v7x alike.
pallas_identity = jax.jit(_pallas_identity_impl, donate_argnums=0)


# ----------------------------------------------------------------------------
# Optional path: a real HBM->HBM copy done as K concurrent chunk DMAs.
# ----------------------------------------------------------------------------
def _make_chunked_copy_kernel(n_chunks: int, chunk: int):
    def kernel(x_hbm_ref, o_hbm_ref, sems):
        copies = [
            pltpu.make_async_copy(
                x_hbm_ref.at[pl.ds(i * chunk, chunk)],
                o_hbm_ref.at[pl.ds(i * chunk, chunk)],
                sems.at[i],
            )
            for i in range(n_chunks)
        ]
        # Start all chunk DMAs first (multiple outstanding descriptors / HBM
        # channels), then wait on all of them.
        for cp in copies:
            cp.start()
        for cp in copies:
            cp.wait()

    return kernel


def pallas_copy(x: jax.Array, max_chunks: int = 4) -> jax.Array:
    """Explicit HBM->HBM copy of `x` using up to `max_chunks` concurrent DMAs.

    Dtype/shape agnostic (no (8,128) block constraint, no padding, no VMEM).
    Exactly 1x read + 1x write of HBM -- the roofline for a forced copy.
    """
    assert x.ndim >= 1, "pallas_copy expects at least a 1-D array"
    lead = x.shape[0]
    n_chunks = 1
    for k in range(min(max_chunks, lead), 0, -1):
        if lead % k == 0:
            n_chunks = k
            break
    chunk = lead // n_chunks

    return pl.pallas_call(
        _make_chunked_copy_kernel(n_chunks, chunk),
        out_shape=jax.ShapeDtypeStruct(x.shape, x.dtype),
        in_specs=[pl.BlockSpec(memory_space=pl.ANY)],
        out_specs=pl.BlockSpec(memory_space=pl.ANY),
        scratch_shapes=[pltpu.SemaphoreType.DMA((n_chunks,))],
    )(x)


# ----------------------------------------------------------------------------
# JAX-side counterpart of models/model_base.py::ModelBase.
# ----------------------------------------------------------------------------
class ModelBasePallas:
    """JAX/Pallas counterpart of models/model_base.py::ModelBase."""

    def __init__(self):
        # ModelBase.__init__ defines no parameters.
        pass

    def init(self, opt=None):
        # PyTorch init() only records options / device choice / save_dir;
        # nothing to compute.  Mirror the bookkeeping where it exists.
        self.opt = opt
        self.gpu_ids = getattr(opt, "gpu_ids", None)
        self.isTrain = getattr(opt, "isTrain", None)
        # TODO(synk): self.Tensor / self.save_dir (checkpoint paths) have no
        # Pallas equivalent; checkpoint I/O (save_net/load_net) not translated.

    def forward(self):
        # PyTorch forward() body is `pass` -> returns None.  Exact semantics.
        return None


if __name__ == "__main__":
    key = jax.random.PRNGKey(0)
    # Small example activation consistent with a typical NCHW model input.
    # (Perf review: realistic benchmarking should use multi-MiB tensors and
    # xprof min-of-N; this tiny shape is only a correctness smoke test.)
    x = jax.random.normal(key, (2, 4, 16, 16), dtype=jnp.float32)
    # Host snapshot BEFORE the call: the device buffer of `x` is donated and
    # invalidated by the zero-copy aliased kernel.
    x_host = np.asarray(x)

    model = ModelBasePallas()
    model.init(opt=None)

    # Exact forward semantics: returns None.
    assert model.forward() is None

    # 1) Zero-copy aliased identity (zero HBM bytes moved).
    y = jax.block_until_ready(pallas_identity(x))
    assert tuple(y.shape) == tuple(x_host.shape)
    assert y.dtype == x_host.dtype
    assert np.array_equal(np.asarray(y), x_host)

    # 2) Forced-copy path: concurrent chunk DMAs, verified bit-exact.
    z = jax.block_until_ready(pallas_copy(y))
    assert tuple(z.shape) == tuple(x_host.shape)
    assert z.dtype == x_host.dtype
    assert np.array_equal(np.asarray(z), x_host)

    print("KERNEL_OK")
</pallas_src>

<mosaic_0001>
module attributes {stable_mosaic.version = 11 : i64} {
  func.func @_aliased_identity_kernel(%arg0: memref<2x4x16x16xf32, #tpu.memory_space<any>>, %arg1: memref<2x4x16x16xf32, #tpu.memory_space<any>>, %arg2: memref<1xi32, #tpu.memory_space<smem>>) attributes {dimension_semantics = [], scalar_prefetch = 0 : i64, scratch_operands = 1 : i64, tpu.core_type = #tpu.core_type<tc>} {
    %c1_i32 = arith.constant 1 : i32
    %c0 = arith.constant 0 : index
    %0 = memref.load %arg2[%c0] : memref<1xi32, #tpu.memory_space<smem>>
    memref.store %c1_i32, %arg2[%c0] : memref<1xi32, #tpu.memory_space<smem>>
    return
  }
}

</mosaic_0001>

<llo_original>
// kernel: _pallas_identity_impl.1
$region0: #{_pallas_identity_impl.1}
  #allocation0 [shape = 'u32[]', space=smem, size = 0x4, offset = 0x4, fixed_abs, tag = 'smem constant byte address 0x4 - core index']
  #allocation1 [shape = 'u32[144,128]{1,0:T(1,128)}', space=vmem, size = 0x12000, scoped, tag = 'internal scratch']
  #allocation2 [shape = 's32[1]{0:T(128)}', space=smem, size = 0x200, scoped, tag = 'scratch operand']
  %s0 = inlined_call_operand.hbm [shape: f32[2,4,16,16], index: 0, kind: input, shape index: {}, may-alias: {0,1}]
  %s1 = inlined_call_operand.hbm [shape: f32[2,4,16,16], index: 1, kind: output, shape index: {}, may-alias: {0,1}]
  %s2 = sld [smem:[#allocation0]]
  $region2: #{_pallas_identity_impl.1} parent=0
    _
  %s4 = ssub.s32 1, %s2
  %s5 = scalar_select 0, %s4, %s2
  %s6 = scalar_lea.smem [#allocation2], 0
  %7 = sst [smem:[%s6]] 1

</llo_original>
